<compile_context>
chip_gen: v7x
topology: tpu7x:2x2x1
jax: 0.10.0
libtpu: 0.0.40
codegen_flags: <defaults>
</compile_context>

<pallas_src>
import functools

import jax
import jax.numpy as jnp
from jax.experimental import pallas as pl
from jax.experimental.pallas import tpu as pltpu

BN_EPS = 1e-5


# ----------------------------------------------------------------------------
# Small helpers
# ----------------------------------------------------------------------------
def _round_up(x, m):
    return (x + m - 1) // m * m


def _pad2(a, rows, cols):
    return jnp.pad(a, ((0, rows - a.shape[0]), (0, cols - a.shape[1])))


def _tpu_defaults():
    """Returns (batch_tile_cap, vmem_limit_bytes), generation-aware."""
    try:
        vmem_bytes = int(pltpu.get_tpu_info().vmem_capacity_bytes)
    except Exception:
        vmem_bytes = 64 << 20  # conservative default: v7x per-TC VMEM
    kind = ""
    try:
        kind = jax.devices()[0].device_kind.lower()
    except Exception:
        pass
    is_v5e = ("v5 lite" in kind) or ("v5e" in kind) or ("v5litepod" in kind)
    # v5e MXU tiles are 128 wide -> TB=128 already fills them; v6e/v7x MXUs
    # are 256 wide and drain/latency-bound at M=128 for these small matmuls.
    tile_cap = 128 if is_v5e else 256
    # Explicit scoped-VMEM limit with headroom for compiler-internal scratch;
    # avoids a silent OOM if the vocab is scaled up (hits v7x first).
    vmem_limit = min(vmem_bytes * 3 // 4, 96 << 20)
    return tile_cap, vmem_limit


def _pick_batch_tile(batch, cap):
    """Sublane-aligned batch tile, >=2 grid steps whenever the batch allows
    (keeps both v7x TensorCores busy), at most `cap` rows per step."""
    if batch <= 8:
        return 8
    n_tiles = max(2, pl.cdiv(batch, cap))
    return min(cap, _round_up(pl.cdiv(batch, n_tiles), 8))


# ----------------------------------------------------------------------------
# Kernels
# ----------------------------------------------------------------------------
def _mlp_epilogue(pooled, w1_ref, b1_ref, w2_ref, b2_ref, out_ref):
    """Linear(D->H) (BN folded) -> ReLU -> Linear(H->C); f32 epilogue, bf16
    MXU inputs with f32 accumulation (safe on v5e: no bf16 VPU/EUP)."""
    h = jnp.dot(pooled.astype(jnp.bfloat16), w1_ref[...],
                preferred_element_type=jnp.float32) + b1_ref[...]
    h = jnp.maximum(h, 0.0)
    logits = jnp.dot(h.astype(jnp.bfloat16), w2_ref[...],
                     preferred_element_type=jnp.float32) + b2_ref[...]
    out_ref[...] = logits.astype(out_ref.dtype)


def fasttext_onehot_kernel(ids_ref, table_ref, w1_ref, b1_ref, w2_ref, b2_ref,
                           out_ref):
    # ids_ref:   (TB, S)   int32  token ids for this batch tile
    # table_ref: (VP, DP)  bf16   zero-padded embedding table (resident, 1-buf)
    # w1_ref:    (DP, HP)  bf16   first Linear with BN folded (resident, 1-buf)
    # b1_ref:    (1,  HP)  f32
    # w2_ref:    (HP, CP)  bf16
    # b2_ref:    (1,  CP)  f32
    # out_ref:   (TB, CP)  f32    lane-dense logits block
    ids = ids_ref[...]
    tb, seq = ids.shape
    vp = table_ref.shape[0]

    # Token-count matrix (TB, VP) built with VPU compares/adds.
    iota_v = jax.lax.broadcasted_iota(jnp.int32, (tb, vp), 1)
    counts = jnp.zeros((tb, vp), jnp.float32)
    if seq <= 64:
        # Small static S: fully unrolled static lane slices.
        for s in range(seq):
            counts = counts + (iota_v == ids[:, s:s + 1]).astype(jnp.float32)
    else:
        # Larger S: bound vreg live ranges but keep LLO scheduler visibility.
        def body(s, c):
            tok = jax.lax.dynamic_slice_in_dim(ids, s, 1, axis=1)
            return c + (iota_v == tok).astype(jnp.float32)
        counts = jax.lax.fori_loop(0, seq, body, counts, unroll=8)

    # Mean pooling on the MXU.  Counts are exact in bf16 only while every
    # per-sequence count <= 256; keep f32 otherwise.
    lhs = counts.astype(jnp.bfloat16) if seq <= 256 else counts
    pooled = jnp.dot(lhs, table_ref[...],
                     preferred_element_type=jnp.float32) * (1.0 / seq)
    _mlp_epilogue(pooled, w1_ref, b1_ref, w2_ref, b2_ref, out_ref)


def fasttext_gather_kernel(seq, batch, ids_ref, table_hbm, w1_ref, b1_ref,
                           w2_ref, b2_ref, out_ref, pooled_ref, row_buf, sem):
    # ids_ref:    (B*S,)     int32  scalar-prefetched token ids in SMEM
    # table_hbm:  (VP, DP)   bf16   embedding table left in HBM (pl.ANY)
    # w1/b1/w2/b2: resident VMEM (single-buffered)
    # out_ref:    (TB, CP)   f32
    # pooled_ref: (TB, DP)   f32    VMEM scratch (per-row embedding sums)
    # row_buf:    (2, 1, DP) bf16   double-buffered DMA landing buffer
    # sem:        DMA semaphores (2,)
    tile = pl.program_id(0)
    tb = out_ref.shape[0]
    dp = pooled_ref.shape[1]
    vmax = table_hbm.shape[0] - 1
    n = tb * seq

    def issue(flat, slot):
        r = flat // seq
        s = flat - r * seq
        # Clamp: ragged tail batch tiles re-fetch row B-1 (their outputs are
        # masked on store anyway) and invalid token ids are clamped in-bounds
        # instead of faulting the bounds-checked DMA.
        row = jnp.minimum(tile * tb + r, batch - 1)
        tid = jnp.clip(ids_ref[row * seq + s], 0, vmax)
        pltpu.make_async_copy(table_hbm.at[pl.ds(tid, 1), :],
                              row_buf.at[slot], sem.at[slot]).start()

    pooled_ref[...] = jnp.zeros_like(pooled_ref)
    issue(0, 0)

    def body(flat, acc):
        slot = flat & 1
        pltpu.make_async_copy(table_hbm.at[pl.ds(0, 1), :],
                              row_buf.at[slot], sem.at[slot]).wait()

        @pl.when(flat + 1 < n)
        def _():
            issue(flat + 1, 1 - slot)

        r = flat // seq
        s = flat - r * seq
        new = row_buf[slot].astype(jnp.float32)          # (1, DP)
        acc = jnp.where(s == 0, new, acc + new)

        @pl.when(s == seq - 1)
        def _():
            pooled_ref[pl.ds(r, 1), :] = acc

        return acc

    jax.lax.fori_loop(0, n, body, jnp.zeros((1, dp), jnp.float32))

    pooled = pooled_ref[...] * (1.0 / seq)
    _mlp_epilogue(pooled, w1_ref, b1_ref, w2_ref, b2_ref, out_ref)


# ----------------------------------------------------------------------------
# Parameter prep (BN fold + lane-dense padding + bf16 casts)
# ----------------------------------------------------------------------------
def prepare_params(embed_table, params, eps=BN_EPS):
    V, D = embed_table.shape
    H = params["w1"].shape[1]
    C = params["w2"].shape[1]
    VP = _round_up(V, 128)
    DP = _round_up(D, 128)
    HP = _round_up(H, 128)
    CP = _round_up(C, 128)

    # Eval-mode BN fold: (x@w1 + b1 - rmean)*scale + beta
    #                  =  x@(w1*scale) + ((b1 - rmean)*scale + beta)
    scale = params["gamma"] * jax.lax.rsqrt(params["rvar"] + eps)        # (1, H)
    w1_f = params["w1"] * scale                                          # (D, H)
    b1_f = (params["b1"] - params["rmean"]) * scale + params["beta"]     # (1, H)

    return {
        "table": _pad2(embed_table, VP, DP).astype(jnp.bfloat16),
        "w1": _pad2(w1_f, DP, HP).astype(jnp.bfloat16),
        "b1": _pad2(b1_f, 1, HP).astype(jnp.float32),
        "w2": _pad2(params["w2"], HP, CP).astype(jnp.bfloat16),
        "b2": _pad2(params["b2"], 1, CP).astype(jnp.float32),
        "dims": (V, D, H, C, VP, DP, HP, CP),
    }


# ----------------------------------------------------------------------------
# Forward wrappers
# ----------------------------------------------------------------------------
def _forward_onehot(token_ids, prep, tile_cap, vmem_limit):
    V, D, H, C, VP, DP, HP, CP = prep["dims"]
    B, S = token_ids.shape
    TB = _pick_batch_tile(B, tile_cap)
    n_tiles = pl.cdiv(B, TB)
    ids = token_ids.astype(jnp.int32)          # no batch pad: ragged tail OK

    resident = dict(pipeline_mode=pl.Buffered(buffer_count=1))
    flops = 2 * B * (VP * DP + DP * HP + HP * CP)
    bytes_accessed = (ids.size * 4 + prep["table"].size * 2
                      + prep["w1"].size * 2 + prep["w2"].size * 2
                      + prep["b1"].size * 4 + prep["b2"].size * 4 + B * CP * 4)

    out = pl.pallas_call(
        fasttext_onehot_kernel,
        out_shape=jax.ShapeDtypeStruct((B, CP), jnp.float32),
        grid=(n_tiles,),
        in_specs=[
            pl.BlockSpec((TB, S), lambda i: (i, 0)),                 # ids tile
            pl.BlockSpec((VP, DP), lambda i: (0, 0), **resident),    # table
            pl.BlockSpec((DP, HP), lambda i: (0, 0), **resident),    # w1
            pl.BlockSpec((1, HP), lambda i: (0, 0), **resident),     # b1
            pl.BlockSpec((HP, CP), lambda i: (0, 0), **resident),    # w2
            pl.BlockSpec((1, CP), lambda i: (0, 0), **resident),     # b2
        ],
        out_specs=pl.BlockSpec((TB, CP), lambda i: (i, 0)),
        compiler_params=pltpu.CompilerParams(
            dimension_semantics=("parallel",),
            vmem_limit_bytes=int(vmem_limit)),
        cost_estimate=pl.CostEstimate(flops=int(flops), transcendentals=0,
                                      bytes_accessed=int(bytes_accessed)),
    )(ids, prep["table"], prep["w1"], prep["b1"], prep["w2"], prep["b2"])
    return out[:, :C]


def _forward_gather(token_ids, prep, tile_cap, vmem_limit):
    V, D, H, C, VP, DP, HP, CP = prep["dims"]
    B, S = token_ids.shape
    TB = _pick_batch_tile(B, tile_cap)
    n_tiles = pl.cdiv(B, TB)
    ids_flat = token_ids.reshape(-1).astype(jnp.int32)   # 1D -> compact SMEM

    kernel = functools.partial(fasttext_gather_kernel, S, B)
    resident = dict(pipeline_mode=pl.Buffered(buffer_count=1))

    grid_spec = pltpu.PrefetchScalarGridSpec(
        num_scalar_prefetch=1,
        grid=(n_tiles,),
        in_specs=[
            pl.BlockSpec(memory_space=pl.ANY),                           # table
            pl.BlockSpec((DP, HP), lambda i, ids: (0, 0), **resident),   # w1
            pl.BlockSpec((1, HP), lambda i, ids: (0, 0), **resident),    # b1
            pl.BlockSpec((HP, CP), lambda i, ids: (0, 0), **resident),   # w2
            pl.BlockSpec((1, CP), lambda i, ids: (0, 0), **resident),    # b2
        ],
        out_specs=pl.BlockSpec((TB, CP), lambda i, ids: (i, 0)),
        scratch_shapes=[
            pltpu.VMEM((TB, DP), jnp.float32),       # pooled sums
            pltpu.VMEM((2, 1, DP), jnp.bfloat16),    # double-buffered row
            pltpu.SemaphoreType.DMA((2,)),
        ],
    )

    flops = 2 * B * (DP * HP + HP * CP) + B * S * DP
    bytes_accessed = (ids_flat.size * 4 + B * S * DP * 2
                      + prep["w1"].size * 2 + prep["w2"].size * 2
                      + prep["b1"].size * 4 + prep["b2"].size * 4 + B * CP * 4)

    out = pl.pallas_call(
        kernel,
        out_shape=jax.ShapeDtypeStruct((B, CP), jnp.float32),
        grid_spec=grid_spec,
        compiler_params=pltpu.CompilerParams(
            dimension_semantics=("parallel",),
            vmem_limit_bytes=int(vmem_limit)),
        cost_estimate=pl.CostEstimate(flops=int(flops), transcendentals=0,
                                      bytes_accessed=int(bytes_accessed)),
    )(ids_flat, prep["table"], prep["w1"], prep["b1"], prep["w2"], prep["b2"])
    return out[:, :C]


def fasttext_forward(token_ids, prep, *, path="auto", batch_tile=None):
    """token_ids: (B, S) int32.  Returns logits (B, C) float32."""
    tile_cap, vmem_limit = _tpu_defaults()
    if batch_tile is not None:
        tile_cap = _round_up(batch_tile, 8)
    if path == "auto":
        V, D, H, C, VP, DP, HP, CP = prep["dims"]
        B, _ = token_ids.shape
        TB = _pick_batch_tile(B, tile_cap)
        weights = (DP * HP + HP * CP) * 2 + (HP + CP) * 4
        resident = (VP * DP * 2 + weights           # single-buffered table/w
                    + TB * VP * 4                   # one-hot counts temp
                    + TB * (DP + 2 * CP) * 4)       # pooled + buffered out
        path = "onehot" if (V <= 2048 and resident * 2 <= vmem_limit) else "gather"
    if path == "onehot":
        return _forward_onehot(token_ids, prep, tile_cap, vmem_limit)
    return _forward_gather(token_ids, prep, tile_cap, vmem_limit)


# ----------------------------------------------------------------------------
# Params / demo
# ----------------------------------------------------------------------------
def init_params(key, vocab, dim, hidden, classes):
    ks = jax.random.split(key, 10)
    embed_table = jax.random.normal(ks[0], (vocab, dim), jnp.float32) * 0.1
    params = {
        # Linear weights stored as (in, out) so the kernel does x @ W.
        "w1": jax.random.normal(ks[1], (dim, hidden), jnp.float32) * 0.05,
        "b1": jax.random.normal(ks[2], (1, hidden), jnp.float32) * 0.01,
        "gamma": 1.0 + 0.1 * jax.random.normal(ks[3], (1, hidden), jnp.float32),
        "beta": 0.01 * jax.random.normal(ks[4], (1, hidden), jnp.float32),
        "rmean": 0.01 * jax.random.normal(ks[5], (1, hidden), jnp.float32),
        "rvar": jax.random.uniform(ks[6], (1, hidden), jnp.float32, 0.5, 1.5),
        "w2": jax.random.normal(ks[7], (hidden, classes), jnp.float32) * 0.05,
        "b2": jax.random.normal(ks[8], (1, classes), jnp.float32) * 0.01,
    }
    return embed_table, params


if __name__ == "__main__":
    VOCAB = 50
    DIM = 32          # embedding_dim
    HIDDEN = 128
    CLASSES = 4       # class_number
    BATCH = 16        # >= 2 batch tiles -> exercises multi-step grid
    SEQ = 16

    key = jax.random.PRNGKey(0)
    k_tok, k_param = jax.random.split(key)

    embed_table, params = init_params(k_param, VOCAB, DIM, HIDDEN, CLASSES)
    token_ids = jax.random.randint(k_tok, (BATCH, SEQ), 0, VOCAB, jnp.int32)

    prep = prepare_params(embed_table, params)

    # Pure-JAX f32 reference (same eval-mode BN semantics as the PyTorch module).
    emb = jnp.take(embed_table, token_ids, axis=0)
    pooled = jnp.mean(emb, axis=1)
    h = pooled @ params["w1"] + params["b1"]
    h = (h - params["rmean"]) * jax.lax.rsqrt(params["rvar"] + BN_EPS) \
        * params["gamma"] + params["beta"]
    h = jnp.maximum(h, 0.0)
    ref = h @ params["w2"] + params["b2"]

    # Exercise both the resident-table path and the HBM row-gather path.
    for path in ("onehot", "gather"):
        logits = jax.block_until_ready(fasttext_forward(token_ids, prep, path=path))
        assert logits.shape == (BATCH, CLASSES)
        max_err = float(jnp.max(jnp.abs(logits - ref)))
        # bf16 matmul inputs (f32 accumulation) -> loosened tolerance vs f32 ref.
        assert jnp.allclose(logits, ref, atol=1e-2, rtol=1e-2), \
            f"path={path} max_err={max_err}"

    print("KERNEL_OK")
</pallas_src>

<mosaic_0001>
module attributes {stable_mosaic.version = 11 : i64} {
  func.func @fasttext_onehot_kernel(%arg0: i32, %arg1: memref<8x16xi32, #tpu.memory_space<vmem>>, %arg2: memref<128x128xbf16, #tpu.memory_space<vmem>>, %arg3: memref<128x128xbf16, #tpu.memory_space<vmem>>, %arg4: memref<1x128xf32, #tpu.memory_space<vmem>>, %arg5: memref<128x128xbf16, #tpu.memory_space<vmem>>, %arg6: memref<1x128xf32, #tpu.memory_space<vmem>>, %arg7: memref<8x128xf32, #tpu.memory_space<vmem>>) attributes {dimension_semantics = [#tpu.dimension_semantics<parallel>], iteration_bounds = array<i64: 2>, scalar_prefetch = 0 : i64, scratch_operands = 0 : i64, tpu.core_type = #tpu.core_type<tc>, window_params = [{transform_indices = @transform_0, window_bounds = array<i64: 8, 16>}, {pipeline_mode = #tpu.pipeline_mode<synchronous>, transform_indices = @transform_1, window_bounds = array<i64: 128, 128>}, {pipeline_mode = #tpu.pipeline_mode<synchronous>, transform_indices = @transform_2, window_bounds = array<i64: 128, 128>}, {pipeline_mode = #tpu.pipeline_mode<synchronous>, transform_indices = @transform_3, window_bounds = array<i64: 1, 128>}, {pipeline_mode = #tpu.pipeline_mode<synchronous>, transform_indices = @transform_4, window_bounds = array<i64: 128, 128>}, {pipeline_mode = #tpu.pipeline_mode<synchronous>, transform_indices = @transform_5, window_bounds = array<i64: 1, 128>}, {transform_indices = @transform_6, window_bounds = array<i64: 8, 128>}]} {
    %c0 = arith.constant 0 : index
    %c0_0 = arith.constant 0 : index
    %0 = vector.load %arg1[%c0, %c0_0] : memref<8x16xi32, #tpu.memory_space<vmem>>, vector<8x16xi32>
    %1 = tpu.iota {dimensions = array<i32: 1>} : vector<8x128xi32>
    %cst = arith.constant 0.000000e+00 : f32
    %2 = vector.broadcast %cst : f32 to vector<8x128xf32>
    %3 = vector.extract_strided_slice %0 {offsets = [0, 0], sizes = [8, 1], strides = [1, 1]} : vector<8x16xi32> to vector<8x1xi32>
    %4 = vector.broadcast %3 : vector<8x1xi32> to vector<8x128xi32>
    %5 = arith.cmpi eq, %1, %4 : vector<8x128xi32>
    %6 = arith.extui %5 : vector<8x128xi1> to vector<8x128xi32>
    %7 = arith.sitofp %6 : vector<8x128xi32> to vector<8x128xf32>
    %8 = arith.addf %2, %7 : vector<8x128xf32>
    %9 = vector.extract_strided_slice %0 {offsets = [0, 1], sizes = [8, 1], strides = [1, 1]} : vector<8x16xi32> to vector<8x1xi32>
    %10 = vector.broadcast %9 : vector<8x1xi32> to vector<8x128xi32>
    %11 = arith.cmpi eq, %1, %10 : vector<8x128xi32>
    %12 = arith.extui %11 : vector<8x128xi1> to vector<8x128xi32>
    %13 = arith.sitofp %12 : vector<8x128xi32> to vector<8x128xf32>
    %14 = arith.addf %8, %13 : vector<8x128xf32>
    %15 = vector.extract_strided_slice %0 {offsets = [0, 2], sizes = [8, 1], strides = [1, 1]} : vector<8x16xi32> to vector<8x1xi32>
    %16 = vector.broadcast %15 : vector<8x1xi32> to vector<8x128xi32>
    %17 = arith.cmpi eq, %1, %16 : vector<8x128xi32>
    %18 = arith.extui %17 : vector<8x128xi1> to vector<8x128xi32>
    %19 = arith.sitofp %18 : vector<8x128xi32> to vector<8x128xf32>
    %20 = arith.addf %14, %19 : vector<8x128xf32>
    %21 = vector.extract_strided_slice %0 {offsets = [0, 3], sizes = [8, 1], strides = [1, 1]} : vector<8x16xi32> to vector<8x1xi32>
    %22 = vector.broadcast %21 : vector<8x1xi32> to vector<8x128xi32>
    %23 = arith.cmpi eq, %1, %22 : vector<8x128xi32>
    %24 = arith.extui %23 : vector<8x128xi1> to vector<8x128xi32>
    %25 = arith.sitofp %24 : vector<8x128xi32> to vector<8x128xf32>
    %26 = arith.addf %20, %25 : vector<8x128xf32>
    %27 = vector.extract_strided_slice %0 {offsets = [0, 4], sizes = [8, 1], strides = [1, 1]} : vector<8x16xi32> to vector<8x1xi32>
    %28 = vector.broadcast %27 : vector<8x1xi32> to vector<8x128xi32>
    %29 = arith.cmpi eq, %1, %28 : vector<8x128xi32>
    %30 = arith.extui %29 : vector<8x128xi1> to vector<8x128xi32>
    %31 = arith.sitofp %30 : vector<8x128xi32> to vector<8x128xf32>
    %32 = arith.addf %26, %31 : vector<8x128xf32>
    %33 = vector.extract_strided_slice %0 {offsets = [0, 5], sizes = [8, 1], strides = [1, 1]} : vector<8x16xi32> to vector<8x1xi32>
    %34 = vector.broadcast %33 : vector<8x1xi32> to vector<8x128xi32>
    %35 = arith.cmpi eq, %1, %34 : vector<8x128xi32>
    %36 = arith.extui %35 : vector<8x128xi1> to vector<8x128xi32>
    %37 = arith.sitofp %36 : vector<8x128xi32> to vector<8x128xf32>
    %38 = arith.addf %32, %37 : vector<8x128xf32>
    %39 = vector.extract_strided_slice %0 {offsets = [0, 6], sizes = [8, 1], strides = [1, 1]} : vector<8x16xi32> to vector<8x1xi32>
    %40 = vector.broadcast %39 : vector<8x1xi32> to vector<8x128xi32>
    %41 = arith.cmpi eq, %1, %40 : vector<8x128xi32>
    %42 = arith.extui %41 : vector<8x128xi1> to vector<8x128xi32>
    %43 = arith.sitofp %42 : vector<8x128xi32> to vector<8x128xf32>
    %44 = arith.addf %38, %43 : vector<8x128xf32>
    %45 = vector.extract_strided_slice %0 {offsets = [0, 7], sizes = [8, 1], strides = [1, 1]} : vector<8x16xi32> to vector<8x1xi32>
    %46 = vector.broadcast %45 : vector<8x1xi32> to vector<8x128xi32>
    %47 = arith.cmpi eq, %1, %46 : vector<8x128xi32>
    %48 = arith.extui %47 : vector<8x128xi1> to vector<8x128xi32>
    %49 = arith.sitofp %48 : vector<8x128xi32> to vector<8x128xf32>
    %50 = arith.addf %44, %49 : vector<8x128xf32>
    %51 = vector.extract_strided_slice %0 {offsets = [0, 8], sizes = [8, 1], strides = [1, 1]} : vector<8x16xi32> to vector<8x1xi32>
    %52 = vector.broadcast %51 : vector<8x1xi32> to vector<8x128xi32>
    %53 = arith.cmpi eq, %1, %52 : vector<8x128xi32>
    %54 = arith.extui %53 : vector<8x128xi1> to vector<8x128xi32>
    %55 = arith.sitofp %54 : vector<8x128xi32> to vector<8x128xf32>
    %56 = arith.addf %50, %55 : vector<8x128xf32>
    %57 = vector.extract_strided_slice %0 {offsets = [0, 9], sizes = [8, 1], strides = [1, 1]} : vector<8x16xi32> to vector<8x1xi32>
    %58 = vector.broadcast %57 : vector<8x1xi32> to vector<8x128xi32>
    %59 = arith.cmpi eq, %1, %58 : vector<8x128xi32>
    %60 = arith.extui %59 : vector<8x128xi1> to vector<8x128xi32>
    %61 = arith.sitofp %60 : vector<8x128xi32> to vector<8x128xf32>
    %62 = arith.addf %56, %61 : vector<8x128xf32>
    %63 = vector.extract_strided_slice %0 {offsets = [0, 10], sizes = [8, 1], strides = [1, 1]} : vector<8x16xi32> to vector<8x1xi32>
    %64 = vector.broadcast %63 : vector<8x1xi32> to vector<8x128xi32>
    %65 = arith.cmpi eq, %1, %64 : vector<8x128xi32>
    %66 = arith.extui %65 : vector<8x128xi1> to vector<8x128xi32>
    %67 = arith.sitofp %66 : vector<8x128xi32> to vector<8x128xf32>
    %68 = arith.addf %62, %67 : vector<8x128xf32>
    %69 = vector.extract_strided_slice %0 {offsets = [0, 11], sizes = [8, 1], strides = [1, 1]} : vector<8x16xi32> to vector<8x1xi32>
    %70 = vector.broadcast %69 : vector<8x1xi32> to vector<8x128xi32>
    %71 = arith.cmpi eq, %1, %70 : vector<8x128xi32>
    %72 = arith.extui %71 : vector<8x128xi1> to vector<8x128xi32>
    %73 = arith.sitofp %72 : vector<8x128xi32> to vector<8x128xf32>
    %74 = arith.addf %68, %73 : vector<8x128xf32>
    %75 = vector.extract_strided_slice %0 {offsets = [0, 12], sizes = [8, 1], strides = [1, 1]} : vector<8x16xi32> to vector<8x1xi32>
    %76 = vector.broadcast %75 : vector<8x1xi32> to vector<8x128xi32>
    %77 = arith.cmpi eq, %1, %76 : vector<8x128xi32>
    %78 = arith.extui %77 : vector<8x128xi1> to vector<8x128xi32>
    %79 = arith.sitofp %78 : vector<8x128xi32> to vector<8x128xf32>
    %80 = arith.addf %74, %79 : vector<8x128xf32>
    %81 = vector.extract_strided_slice %0 {offsets = [0, 13], sizes = [8, 1], strides = [1, 1]} : vector<8x16xi32> to vector<8x1xi32>
    %82 = vector.broadcast %81 : vector<8x1xi32> to vector<8x128xi32>
    %83 = arith.cmpi eq, %1, %82 : vector<8x128xi32>
    %84 = arith.extui %83 : vector<8x128xi1> to vector<8x128xi32>
    %85 = arith.sitofp %84 : vector<8x128xi32> to vector<8x128xf32>
    %86 = arith.addf %80, %85 : vector<8x128xf32>
    %87 = vector.extract_strided_slice %0 {offsets = [0, 14], sizes = [8, 1], strides = [1, 1]} : vector<8x16xi32> to vector<8x1xi32>
    %88 = vector.broadcast %87 : vector<8x1xi32> to vector<8x128xi32>
    %89 = arith.cmpi eq, %1, %88 : vector<8x128xi32>
    %90 = arith.extui %89 : vector<8x128xi1> to vector<8x128xi32>
    %91 = arith.sitofp %90 : vector<8x128xi32> to vector<8x128xf32>
    %92 = arith.addf %86, %91 : vector<8x128xf32>
    %93 = vector.extract_strided_slice %0 {offsets = [0, 15], sizes = [8, 1], strides = [1, 1]} : vector<8x16xi32> to vector<8x1xi32>
    %94 = vector.broadcast %93 : vector<8x1xi32> to vector<8x128xi32>
    %95 = arith.cmpi eq, %1, %94 : vector<8x128xi32>
    %96 = arith.extui %95 : vector<8x128xi1> to vector<8x128xi32>
    %97 = arith.sitofp %96 : vector<8x128xi32> to vector<8x128xf32>
    %98 = arith.addf %92, %97 : vector<8x128xf32>
    %99 = arith.truncf %98 : vector<8x128xf32> to vector<8x128xbf16>
    %c0_1 = arith.constant 0 : index
    %c0_2 = arith.constant 0 : index
    %100 = vector.load %arg2[%c0_1, %c0_2] : memref<128x128xbf16, #tpu.memory_space<vmem>>, vector<128x128xbf16>
    %cst_3 = arith.constant dense<0.000000e+00> : vector<8x128xf32>
    %101 = tpu.matmul %99, %100, %cst_3 {dimension_numbers = #tpu.dot_dimension_numbers<[1], [0], [0], [1], [0, 0, 1, 1], [], []>} : vector<8x128xbf16>, vector<128x128xbf16>, vector<8x128xf32> -> vector<8x128xf32>
    %cst_4 = arith.constant 6.250000e-02 : f32
    %102 = vector.broadcast %cst_4 : f32 to vector<8x128xf32>
    %103 = arith.mulf %101, %102 : vector<8x128xf32>
    %104 = arith.truncf %103 : vector<8x128xf32> to vector<8x128xbf16>
    %c0_5 = arith.constant 0 : index
    %c0_6 = arith.constant 0 : index
    %105 = vector.load %arg3[%c0_5, %c0_6] : memref<128x128xbf16, #tpu.memory_space<vmem>>, vector<128x128xbf16>
    %cst_7 = arith.constant dense<0.000000e+00> : vector<8x128xf32>
    %106 = tpu.matmul %104, %105, %cst_7 {dimension_numbers = #tpu.dot_dimension_numbers<[1], [0], [0], [1], [0, 0, 1, 1], [], []>} : vector<8x128xbf16>, vector<128x128xbf16>, vector<8x128xf32> -> vector<8x128xf32>
    %c0_8 = arith.constant 0 : index
    %c0_9 = arith.constant 0 : index
    %107 = vector.load %arg4[%c0_8, %c0_9] : memref<1x128xf32, #tpu.memory_space<vmem>>, vector<1x128xf32>
    %108 = vector.broadcast %107 : vector<1x128xf32> to vector<8x128xf32>
    %109 = arith.addf %106, %108 : vector<8x128xf32>
    %cst_10 = arith.constant 0.000000e+00 : f32
    %110 = vector.broadcast %cst_10 : f32 to vector<8x128xf32>
    %111 = arith.maximumf %109, %110 : vector<8x128xf32>
    %112 = arith.truncf %111 : vector<8x128xf32> to vector<8x128xbf16>
    %c0_11 = arith.constant 0 : index
    %c0_12 = arith.constant 0 : index
    %113 = vector.load %arg5[%c0_11, %c0_12] : memref<128x128xbf16, #tpu.memory_space<vmem>>, vector<128x128xbf16>
    %cst_13 = arith.constant dense<0.000000e+00> : vector<8x128xf32>
    %114 = tpu.matmul %112, %113, %cst_13 {dimension_numbers = #tpu.dot_dimension_numbers<[1], [0], [0], [1], [0, 0, 1, 1], [], []>} : vector<8x128xbf16>, vector<128x128xbf16>, vector<8x128xf32> -> vector<8x128xf32>
    %c0_14 = arith.constant 0 : index
    %c0_15 = arith.constant 0 : index
    %115 = vector.load %arg6[%c0_14, %c0_15] : memref<1x128xf32, #tpu.memory_space<vmem>>, vector<1x128xf32>
    %116 = vector.broadcast %115 : vector<1x128xf32> to vector<8x128xf32>
    %117 = arith.addf %114, %116 : vector<8x128xf32>
    %c0_16 = arith.constant 0 : index
    %c0_17 = arith.constant 0 : index
    %118 = vector.load %arg7[%c0_16, %c0_17] : memref<8x128xf32, #tpu.memory_space<vmem>>, vector<8x128xf32>
    tpu.vector_store %arg7[%c0_16, %c0_17], %117 {strides = array<i32>} : memref<8x128xf32, #tpu.memory_space<vmem>>, vector<8x128xf32>,
    return
  }
  func.func @transform_0(%arg0: i32) -> (i32, i32) {
    %c0_i32 = arith.constant 0 : i32
    %c0_i32_0 = arith.constant 0 : i32
    return %arg0, %c0_i32 : i32, i32
  }
  func.func @transform_1(%arg0: i32) -> (i32, i32) {
    %c0_i32 = arith.constant 0 : i32
    %c0_i32_0 = arith.constant 0 : i32
    %c0_i32_1 = arith.constant 0 : i32
    return %c0_i32, %c0_i32_0 : i32, i32
  }
  func.func @transform_2(%arg0: i32) -> (i32, i32) {
    %c0_i32 = arith.constant 0 : i32
    %c0_i32_0 = arith.constant 0 : i32
    %c0_i32_1 = arith.constant 0 : i32
    return %c0_i32, %c0_i32_0 : i32, i32
  }
  func.func @transform_3(%arg0: i32) -> (i32, i32) {
    %c0_i32 = arith.constant 0 : i32
    %c0_i32_0 = arith.constant 0 : i32
    %c0_i32_1 = arith.constant 0 : i32
    return %c0_i32, %c0_i32_0 : i32, i32
  }
  func.func @transform_4(%arg0: i32) -> (i32, i32) {
    %c0_i32 = arith.constant 0 : i32
    %c0_i32_0 = arith.constant 0 : i32
    %c0_i32_1 = arith.constant 0 : i32
    return %c0_i32, %c0_i32_0 : i32, i32
  }
  func.func @transform_5(%arg0: i32) -> (i32, i32) {
    %c0_i32 = arith.constant 0 : i32
    %c0_i32_0 = arith.constant 0 : i32
    %c0_i32_1 = arith.constant 0 : i32
    return %c0_i32, %c0_i32_0 : i32, i32
  }
  func.func @transform_6(%arg0: i32) -> (i32, i32) {
    %c0_i32 = arith.constant 0 : i32
    %c0_i32_0 = arith.constant 0 : i32
    return %arg0, %c0_i32 : i32, i32
  }
}

</mosaic_0001>

<llo_original>
// kernel: tpu_custom_call.1
$region0: #{tpu_custom_call.1}
  #allocation0 [shape = 'u32[]', space=smem, size = 0x4, offset = 0x4, fixed_abs, tag = 'smem constant byte address 0x4 - core index']
  #allocation1 [shape = 'u32[144,128]{1,0:T(1,128)}', space=vmem, size = 0x12000, scoped, tag = 'internal scratch']
  %s0 = inlined_call_operand.hbm [shape: s32[16,16], index: 0, kind: input, shape index: {}]
  %s1 = inlined_call_operand.hbm [shape: bf16[128,128], index: 1, kind: input, shape index: {}]
  %s2 = inlined_call_operand.hbm [shape: bf16[128,128], index: 2, kind: input, shape index: {}]
  %s3 = inlined_call_operand.vmem [shape: f32[1,128], index: 3, kind: input, shape index: {}]
  %s4 = inlined_call_operand.hbm [shape: bf16[128,128], index: 4, kind: input, shape index: {}]
  %s5 = inlined_call_operand.vmem [shape: f32[1,128], index: 5, kind: input, shape index: {}]
  %s6 = inlined_call_operand.hbm [shape: f32[16,128], index: 6, kind: output, shape index: {}]
  %s7 = sld [smem:[#allocation0]]
  $region73: #{tpu_custom_call.1} parent=0
    _
  %s9 = ssub.s32 1, %s7
  %s10 = scalar_select 0, %s9, %s7
  $region1: #{tpu_custom_call.1} parent=0
    #allocation2 [shape = 'u8[8192]{0}', space=vmem, size = 0x2000, scoped, tag = 'input window, operand 0']
    #allocation3 [shape = 's32[2]{0}', space=sflag, size = 0x8, scoped, tag = 'scoped memory for tpu_custom_call.1']
    #allocation4 [shape = 's32[2]{0}', space=sflag, size = 0x8, scoped, tag = 'scoped memory for tpu_custom_call.1']
    #allocation5 [shape = 'u8[32768]{0}', space=vmem, size = 0x8000, scoped, tag = 'input window, operand 1, single buffered']
    #allocation6 [shape = 's32[1]{0}', space=sflag, size = 0x4, scoped, tag = 'scoped memory for tpu_custom_call.1']
    #allocation7 [shape = 'u8[32768]{0}', space=vmem, size = 0x8000, scoped, tag = 'input window, operand 2, single buffered']
    #allocation8 [shape = 'u8[32768]{0}', space=vmem, size = 0x8000, scoped, tag = 'input window, operand 4, single buffered']
    #allocation9 [shape = 's32[1]{0}', space=sflag, size = 0x4, scoped, tag = 'scoped memory for tpu_custom_call.1']
    #allocation10 [shape = 'u8[8192]{0}', space=vmem, size = 0x2000, scoped, tag = 'output window, operand 0']
    %11 = vsyncpa [#allocation3], 0
    %s12 = scalar_lea.sflag [#allocation3], 1
    %13 = vsyncpa %s12, 0
    %14 = vsyncpa [#allocation6], 0
    %15 = vsyncpa [#allocation9], 0
    %16 = vsyncpa [#allocation4], 0
    %s17 = scalar_lea.sflag [#allocation4], 1
    %18 = vsyncpa %s17, 0
    loop: start=0, step=1, limit=4
    $region2: #{tpu_custom_call.1} parent=1 // loop_pre_header
      _
    $region3: #{tpu_custom_call.1} parent=1 // loop_header
      %s20 = sphi 0, %s24
      %p21 = scmp.ge.s32.totalorder %s20, 4
      %s30 = sphi 0, %s32
      %s33 = sphi 0, %s30
      %s34 = sphi 0, %s33
      %s50 = sphi 0, %s34
      %s54 = sphi 0, %s54
      %s56 = sphi 0, %s54
      %s57 = sphi 0, %s56
      %s71 = sphi 0, %s57
      %s75 = sphi 0, %s75
      %s77 = sphi 0, %s75
      %s78 = sphi 0, %s77
      %s92 = sphi 0, %s78
      %s96 = sphi 0, %s96
      %s98 = sphi 0, %s96
      %s99 = sphi 0, %s98
      %s113 = sphi 0, %s99
      %s117 = sphi 0, %s117
      %s119 = sphi 0, %s117
      %s120 = sphi 0, %s119
      %s134 = sphi 0, %s120
      %s138 = sphi 0, %s138
      %s140 = sphi 0, %s138
      %s141 = sphi 0, %s140
      %s155 = sphi 0, %s141
      %s161 = sphi 0, %s163
      %s164 = sphi 0, %s161
      %s165 = sphi 0, %s164
      %s181 = sphi 0, %s165
    $region4: #{tpu_custom_call.1} parent=1 // loop_header_branch
      %23 = sbr.rel (%p21) target = $region8
    $region5: #{tpu_custom_call.1} parent=1 // loop_body
      %s25 = ssub.s32 %s20, 1
      %s26 = ssub.s32 %s20, 2
      %s27 = sadd.s32 %s20, 1
      %s28 = ssub.s32 %s20, %s27
      %p29 = scmp.eq.s32.totalorder %s28, 0
      %s31 = sadd.s32 %s30, 1
      %s32 = scalar_select %p29, %s30, %s31
      %p35 = pneg %p29
      %p36 = scmp.eq.s32.totalorder %s20, 1
      %p37 = por %p35, %p36
      %p38 = scmp.ne.s32.totalorder %s30, %s33
      %p39 = scmp.eq.s32.totalorder %s20, 0
      %p40 = por %p38, %p39
      %p41 = scmp.ne.s32.totalorder %s30, %s33
      %p42 = scmp.eq.s32.totalorder %s25, 1
      %p43 = por %p41, %p42
      %p44 = scmp.ne.s32.totalorder %s33, %s34
      %p45 = scmp.eq.s32.totalorder %s25, 0
      %p46 = por %p44, %p45
      %p47 = scmp.ne.s32.totalorder %s33, %s34
      %p48 = scmp.eq.s32.totalorder %s26, 1
      %p49 = por %p47, %p48
      %p51 = scmp.ne.s32.totalorder %s34, %s50
      %p52 = scmp.eq.s32.totalorder %s26, 0
      %p53 = por %p51, %p52
      %s55 = sadd.s32 %s54, 1
      %p58 = scmp.eq.s32.totalorder %s20, 1
      %p59 = scmp.ne.s32.totalorder %s54, %s56
      %p60 = scmp.eq.s32.totalorder %s20, 0
      %p61 = por %p59, %p60
      %p62 = scmp.ne.s32.totalorder %s54, %s56
      %p63 = scmp.eq.s32.totalorder %s25, 1
      %p64 = por %p62, %p63
      %p65 = scmp.ne.s32.totalorder %s56, %s57
      %p66 = scmp.eq.s32.totalorder %s25, 0
      %p67 = por %p65, %p66
      %p68 = scmp.ne.s32.totalorder %s56, %s57
      %p69 = scmp.eq.s32.totalorder %s26, 1
      %p70 = por %p68, %p69
      %p72 = scmp.ne.s32.totalorder %s57, %s71
      %p73 = scmp.eq.s32.totalorder %s26, 0
      %p74 = por %p72, %p73
      %s76 = sadd.s32 %s75, 1
      %p79 = scmp.eq.s32.totalorder %s20, 1
      %p80 = scmp.ne.s32.totalorder %s75, %s77
      %p81 = scmp.eq.s32.totalorder %s20, 0
      %p82 = por %p80, %p81
      %p83 = scmp.ne.s32.totalorder %s75, %s77
      %p84 = scmp.eq.s32.totalorder %s25, 1
      %p85 = por %p83, %p84
      %p86 = scmp.ne.s32.totalorder %s77, %s78
      %p87 = scmp.eq.s32.totalorder %s25, 0
      %p88 = por %p86, %p87
      %p89 = scmp.ne.s32.totalorder %s77, %s78
      %p90 = scmp.eq.s32.totalorder %s26, 1
      %p91 = por %p89, %p90
      %p93 = scmp.ne.s32.totalorder %s78, %s92
      %p94 = scmp.eq.s32.totalorder %s26, 0
      %p95 = por %p93, %p94
      %s97 = sadd.s32 %s96, 1
      %p100 = scmp.eq.s32.totalorder %s20, 1
      %p101 = scmp.ne.s32.totalorder %s96, %s98
      %p102 = scmp.eq.s32.totalorder %s20, 0
      %p103 = por %p101, %p102
      %p104 = scmp.ne.s32.totalorder %s96, %s98
      %p105 = scmp.eq.s32.totalorder %s25, 1
      %p106 = por %p104, %p105
      %p107 = scmp.ne.s32.totalorder %s98, %s99
      %p108 = scmp.eq.s32.totalorder %s25, 0
      %p109 = por %p107, %p108
      %p110 = scmp.ne.s32.totalorder %s98, %s99
      %p111 = scmp.eq.s32.totalorder %s26, 1
      %p112 = por %p110, %p111
      %p114 = scmp.ne.s32.totalorder %s99, %s113
      %p115 = scmp.eq.s32.totalorder %s26, 0
      %p116 = por %p114, %p115
      %s118 = sadd.s32 %s117, 1
      %p121 = scmp.eq.s32.totalorder %s20, 1
      %p122 = scmp.ne.s32.totalorder %s117, %s119
      %p123 = scmp.eq.s32.totalorder %s20, 0
      %p124 = por %p122, %p123
      %p125 = scmp.ne.s32.totalorder %s117, %s119
      %p126 = scmp.eq.s32.totalorder %s25, 1
      %p127 = por %p125, %p126
      %p128 = scmp.ne.s32.totalorder %s119, %s120
      %p129 = scmp.eq.s32.totalorder %s25, 0
      %p130 = por %p128, %p129
      %p131 = scmp.ne.s32.totalorder %s119, %s120
      %p132 = scmp.eq.s32.totalorder %s26, 1
      %p133 = por %p131, %p132
      %p135 = scmp.ne.s32.totalorder %s120, %s134
      %p136 = scmp.eq.s32.totalorder %s26, 0
      %p137 = por %p135, %p136
      %s139 = sadd.s32 %s138, 1
      %p142 = scmp.eq.s32.totalorder %s20, 1
      %p143 = scmp.ne.s32.totalorder %s138, %s140
      %p144 = scmp.eq.s32.totalorder %s20, 0
      %p145 = por %p143, %p144
      %p146 = scmp.ne.s32.totalorder %s138, %s140
      %p147 = scmp.eq.s32.totalorder %s25, 1
      %p148 = por %p146, %p147
      %p149 = scmp.ne.s32.totalorder %s140, %s141
      %p150 = scmp.eq.s32.totalorder %s25, 0
      %p151 = por %p149, %p150
      %p152 = scmp.ne.s32.totalorder %s140, %s141
      %p153 = scmp.eq.s32.totalorder %s26, 1
      %p154 = por %p152, %p153
      %p156 = scmp.ne.s32.totalorder %s141, %s155
      %p157 = scmp.eq.s32.totalorder %s26, 0
      %p158 = por %p156, %p157
      %s159 = ssub.s32 %s20, %s27
      %p160 = scmp.eq.s32.totalorder %s159, 0
      %s162 = sadd.s32 %s161, 1
      %s163 = scalar_select %p160, %s161, %s162
      %p166 = pneg %p160
      %p167 = scmp.eq.s32.totalorder %s20, 1
      %p168 = por %p166, %p167
      %p169 = scmp.ne.s32.totalorder %s161, %s164
      %p170 = scmp.eq.s32.totalorder %s20, 0
      %p171 = por %p169, %p170
      %p172 = scmp.ne.s32.totalorder %s161, %s164
      %p173 = scmp.eq.s32.totalorder %s25, 1
      %p174 = por %p172, %p173
      %p175 = scmp.ne.s32.totalorder %s164, %s165
      %p176 = scmp.eq.s32.totalorder %s25, 0
      %p177 = por %p175, %p176
      %p178 = scmp.ne.s32.totalorder %s164, %s165
      %p179 = scmp.eq.s32.totalorder %s26, 1
      %p180 = por %p178, %p179
      %p182 = scmp.ne.s32.totalorder %s165, %s181
      %p183 = scmp.eq.s32.totalorder %s26, 0
      %p184 = por %p182, %p183
      %p185 = scmp.le.s32.totalorder 1, %s20
      %p186 = scmp.lt.s32.totalorder %s20, 3
      %p187 = pnand %p185, %p186
      %p188 = pneg %p187
      // Predicated region
      $region9: #{tpu_custom_call.1} parent=5 // pred_check
        _
      $region10: #{tpu_custom_call.1} parent=5 // pred_check_branch
        %190 = sbr.rel (%p187) target = $region12
      $region11: #{tpu_custom_call.1} parent=5 // pred_region
        %s191 = ssub.s32 %s20, 1
        // Predicated region
        $region13: #{tpu_custom_call.1} parent=11 // pred_check
          %p192 = pneg %p67
        $region14: #{tpu_custom_call.1} parent=11 // pred_check_branch
          %194 = sbr.rel (%p192) target = $region16
        $region15: #{tpu_custom_call.1} parent=11 // pred_region
          %s196 = ssub.s32 1024, 1024
          %197 = vsyncadd [#allocation6], %s196
          %s198 = sshll.u32 [#allocation5], 4
          %s199 = int_to_ptr.vmem [resolvable:$true] %s198
          %204 = dma.hbm_to_vmem [thread:$0]  %s1, 1024, %s199, [#allocation6], 64, 64, 4
        $region16: #{tpu_custom_call.1} parent=11 // pred_fallthru
          _
        // Predicated region
        $region17: #{tpu_custom_call.1} parent=11 // pred_check
          %p205 = pneg %p88
        $region18: #{tpu_custom_call.1} parent=11 // pred_check_branch
          %207 = sbr.rel (%p205) target = $region20
        $region19: #{tpu_custom_call.1} parent=11 // pred_region
          %s209 = ssub.s32 1024, 1024
          %210 = vsyncadd [#allocation6], %s209
          %s211 = sshll.u32 [#allocation7], 4
          %s212 = int_to_ptr.vmem [resolvable:$true] %s211
          %217 = dma.hbm_to_vmem [thread:$0]  %s2, 1024, %s212, [#allocation6], 64, 64, 4
        $region20: #{tpu_custom_call.1} parent=11 // pred_fallthru
          _
        // Predicated region
        $region21: #{tpu_custom_call.1} parent=11 // pred_check
          %p218 = pneg %p109
        $region22: #{tpu_custom_call.1} parent=11 // pred_check_branch
          %220 = sbr.rel (%p218) target = $region24
        $region23: #{tpu_custom_call.1} parent=11 // pred_region
          _
        $region24: #{tpu_custom_call.1} parent=11 // pred_fallthru
          _
        // Predicated region
        $region25: #{tpu_custom_call.1} parent=11 // pred_check
          %p221 = pneg %p130
        $region26: #{tpu_custom_call.1} parent=11 // pred_check_branch
          %223 = sbr.rel (%p221) target = $region28
        $region27: #{tpu_custom_call.1} parent=11 // pred_region
          %s225 = ssub.s32 1024, 1024
          %226 = vsyncadd [#allocation9], %s225
          %s227 = sshll.u32 [#allocation8], 4
          %s228 = int_to_ptr.vmem [resolvable:$true] %s227
          %233 = dma.hbm_to_vmem [thread:$0]  %s4, 1024, %s228, [#allocation9], 64, 64, 4
        $region28: #{tpu_custom_call.1} parent=11 // pred_fallthru
          _
        // Predicated region
        $region29: #{tpu_custom_call.1} parent=11 // pred_check
          %p234 = pneg %p151
        $region30: #{tpu_custom_call.1} parent=11 // pred_check_branch
          %236 = sbr.rel (%p234) target = $region32
        $region31: #{tpu_custom_call.1} parent=11 // pred_region
          _
        $region32: #{tpu_custom_call.1} parent=11 // pred_fallthru
          _
      $region12: #{tpu_custom_call.1} parent=5 // pred_fallthru
        _
      %p237 = scmp.lt.s32.totalorder %s20, 2
      // Predicated region
      $region33: #{tpu_custom_call.1} parent=5 // pred_check
        %p238 = pneg %p237
      $region34: #{tpu_custom_call.1} parent=5 // pred_check_branch
        %240 = sbr.rel (%p238) target = $region36
      $region35: #{tpu_custom_call.1} parent=5 // pred_region
        // Predicated region
        $region37: #{tpu_custom_call.1} parent=35 // pred_check
          %p241 = pneg %p40
        $region38: #{tpu_custom_call.1} parent=35 // pred_check_branch
          %243 = sbr.rel (%p241) target = $region40
        $region39: #{tpu_custom_call.1} parent=35 // pred_region
          %s244 = sand.u32 %s30, 1
          %s245 = scalar_lea.sflag [#allocation3], %s244
          %s246 = sand.u32 %s30, 1
          %s247 = smul.addr %s246, 8
          %s248 = scalar_lea.vmem [#allocation2], %s247
          %s250 = ssub.s32 128, 128
          %251 = vsyncadd %s245, %s250
          %s252 = smul.addr %s20, 128
          %s253 = scalar_lea.hbm %s0, %s252
          %s255 = sshll.u32 %s248, 4
          %s256 = int_to_ptr.vmem [resolvable:$true] %s255
          %258 = dma.hbm_to_vmem [thread:$0]  %s253, 128, %s256, %s245
        $region40: #{tpu_custom_call.1} parent=35 // pred_fallthru
          _
      $region36: #{tpu_custom_call.1} parent=5 // pred_fallthru
        _
      %p259 = scmp.le.s32.totalorder 1, %s20
      %p260 = scmp.lt.s32.totalorder %s20, 3
      %p261 = pnand %p259, %p260
      %p262 = pneg %p261
      // Predicated region
      $region41: #{tpu_custom_call.1} parent=5 // pred_check
        _
      $region42: #{tpu_custom_call.1} parent=5 // pred_check_branch
        %264 = sbr.rel (%p261) target = $region44
      $region43: #{tpu_custom_call.1} parent=5 // pred_region
        %s265 = ssub.s32 %s20, 1
        %s266 = sand.u32 %s33, 1
        %s267 = scalar_lea.sflag [#allocation3], %s266
        %s268 = sand.u32 %s33, 1
        %s269 = smul.addr %s268, 8
        %s270 = scalar_lea.vmem [#allocation2], %s269
        // Predicated region
        $region45: #{tpu_custom_call.1} parent=43 // pred_check
          %p271 = pneg %p46
        $region46: #{tpu_custom_call.1} parent=43 // pred_check_branch
          %273 = sbr.rel (%p271) target = $region48
        $region47: #{tpu_custom_call.1} parent=43 // pred_region
          %274 = dma.done %s267, 128
        $region48: #{tpu_custom_call.1} parent=43 // pred_fallthru
          _
        // Predicated region
        $region49: #{tpu_custom_call.1} parent=43 // pred_check
          %p275 = pneg %p67
        $region50: #{tpu_custom_call.1} parent=43 // pred_check_branch
          %277 = sbr.rel (%p275) target = $region52
        $region51: #{tpu_custom_call.1} parent=43 // pred_region
          %278 = dma.done [#allocation6], 1024
        $region52: #{tpu_custom_call.1} parent=43 // pred_fallthru
          _
        // Predicated region
        $region53: #{tpu_custom_call.1} parent=43 // pred_check
          %p279 = pneg %p88
        $region54: #{tpu_custom_call.1} parent=43 // pred_check_branch
          %281 = sbr.rel (%p279) target = $region56
        $region55: #{tpu_custom_call.1} parent=43 // pred_region
          %282 = dma.done [#allocation6], 1024
        $region56: #{tpu_custom_call.1} parent=43 // pred_fallthru
          _
        // Predicated region
        $region57: #{tpu_custom_call.1} parent=43 // pred_check
          %p283 = pneg %p130
        $region58: #{tpu_custom_call.1} parent=43 // pred_check_branch
          %285 = sbr.rel (%p283) target = $region60
        $region59: #{tpu_custom_call.1} parent=43 // pred_region
          %286 = dma.done [#allocation9], 1024
        $region60: #{tpu_custom_call.1} parent=43 // pred_fallthru
          _
        %s287 = sand.u32 %s33, 1
        %s288 = scalar_lea.sflag [#allocation3], %s287
        %s289 = sand.u32 %s33, 1
        %s290 = smul.addr %s289, 8
        %s291 = scalar_lea.vmem [#allocation2], %s290
        %p292 = pneg %p46
        %p293 = pneg %p43
        %p294 = pneg %p67
        %p295 = pneg %p64
        %p296 = pneg %p88
        %p297 = pneg %p85
        %p298 = pneg %p109
        %p299 = pneg %p106
        %p300 = pneg %p130
        %p301 = pneg %p127
        %p302 = pneg %p151
        %p303 = pneg %p148
        %p304 = pneg %p177
        %p305 = pneg %p174
        %s306 = sand.u32 %s164, 1
        %s307 = scalar_lea.sflag [#allocation4], %s306
        %s308 = sand.u32 %s164, 1
        %s309 = smul.addr %s308, 8
        %s310 = scalar_lea.vmem [#allocation10], %s309
        %v312 = vld [vmem:[%s270] sm:$0xff]
        %v313 = vlaneseq
        %v314 = vand.u32 %v313, 127
        %315 = vset.pattern.permute.xlu0 0
        %316 = vperm.xlu0 %315, %v312
        %v317 = vpop.permute.xlu0 %316
        %vm318 = vcmp.eq.s32.totalorder %v314, %v317
        %v319 = vsel %vm318, 1, 0
        %v320 = vcvt.s32.f32 %v319
        %v321 = vadd.f32 %v320, 0.0
        %322 = vset.pattern.permute.xlu0 1
        %323 = vperm.xlu0 %322, %v312
        %v324 = vpop.permute.xlu0 %323
        %vm325 = vcmp.eq.s32.totalorder %v314, %v324
        %v326 = vsel %vm325, 1, 0
        %v327 = vcvt.s32.f32 %v326
        %v328 = vadd.f32 %v321, %v327
        %329 = vset.pattern.permute.xlu0 2
        %330 = vperm.xlu0 %329, %v312
        %v331 = vpop.permute.xlu0 %330
        %vm332 = vcmp.eq.s32.totalorder %v314, %v331
        %v333 = vsel %vm332, 1, 0
        %v334 = vcvt.s32.f32 %v333
        %v335 = vadd.f32 %v328, %v334
        %336 = vset.pattern.permute.xlu0 3
        %337 = vperm.xlu0 %336, %v312
        %v338 = vpop.permute.xlu0 %337
        %vm339 = vcmp.eq.s32.totalorder %v314, %v338
        %v340 = vsel %vm339, 1, 0
        %v341 = vcvt.s32.f32 %v340
        %v342 = vadd.f32 %v335, %v341
        %343 = vset.pattern.permute.xlu0 4
        %344 = vperm.xlu0 %343, %v312
        %v345 = vpop.permute.xlu0 %344
        %vm346 = vcmp.eq.s32.totalorder %v314, %v345
        %v347 = vsel %vm346, 1, 0
        %v348 = vcvt.s32.f32 %v347
        %v349 = vadd.f32 %v342, %v348
        %350 = vset.pattern.permute.xlu0 5
        %351 = vperm.xlu0 %350, %v312
        %v352 = vpop.permute.xlu0 %351
        %vm353 = vcmp.eq.s32.totalorder %v314, %v352
        %v354 = vsel %vm353, 1, 0
        %v355 = vcvt.s32.f32 %v354
        %v356 = vadd.f32 %v349, %v355
        %357 = vset.pattern.permute.xlu0 6
        %358 = vperm.xlu0 %357, %v312
        %v359 = vpop.permute.xlu0 %358
        %vm360 = vcmp.eq.s32.totalorder %v314, %v359
        %v361 = vsel %vm360, 1, 0
        %v362 = vcvt.s32.f32 %v361
        %v363 = vadd.f32 %v356, %v362
        %364 = vset.pattern.permute.xlu0 7
        %365 = vperm.xlu0 %364, %v312
        %v366 = vpop.permute.xlu0 %365
        %vm367 = vcmp.eq.s32.totalorder %v314, %v366
        %v368 = vsel %vm367, 1, 0
        %v369 = vcvt.s32.f32 %v368
        %v370 = vadd.f32 %v363, %v369
        %371 = vset.pattern.permute.xlu0 8
        %372 = vperm.xlu0 %371, %v312
        %v373 = vpop.permute.xlu0 %372
        %vm374 = vcmp.eq.s32.totalorder %v314, %v373
        %v375 = vsel %vm374, 1, 0
        %v376 = vcvt.s32.f32 %v375
        %v377 = vadd.f32 %v370, %v376
        %378 = vset.pattern.permute.xlu0 9
        %379 = vperm.xlu0 %378, %v312
        %v380 = vpop.permute.xlu0 %379
        %vm381 = vcmp.eq.s32.totalorder %v314, %v380
        %v382 = vsel %vm381, 1, 0
        %v383 = vcvt.s32.f32 %v382
        %v384 = vadd.f32 %v377, %v383
        %385 = vset.pattern.permute.xlu0 10
        %386 = vperm.xlu0 %385, %v312
        %v387 = vpop.permute.xlu0 %386
        %vm388 = vcmp.eq.s32.totalorder %v314, %v387
        %v389 = vsel %vm388, 1, 0
        %v390 = vcvt.s32.f32 %v389
        %v391 = vadd.f32 %v384, %v390
        %392 = vset.pattern.permute.xlu0 11
        %393 = vperm.xlu0 %392, %v312
        %v394 = vpop.permute.xlu0 %393
        %vm395 = vcmp.eq.s32.totalorder %v314, %v394
        %v396 = vsel %vm395, 1, 0
        %v397 = vcvt.s32.f32 %v396
        %v398 = vadd.f32 %v391, %v397
        %399 = vset.pattern.permute.xlu0 12
        %400 = vperm.xlu0 %399, %v312
        %v401 = vpop.permute.xlu0 %400
        %vm402 = vcmp.eq.s32.totalorder %v314, %v401
        %v403 = vsel %vm402, 1, 0
        %v404 = vcvt.s32.f32 %v403
        %v405 = vadd.f32 %v398, %v404
        %406 = vset.pattern.permute.xlu0 13
        %407 = vperm.xlu0 %406, %v312
        %v408 = vpop.permute.xlu0 %407
        %vm409 = vcmp.eq.s32.totalorder %v314, %v408
        %v410 = vsel %vm409, 1, 0
        %v411 = vcvt.s32.f32 %v410
        %v412 = vadd.f32 %v405, %v411
        %413 = vset.pattern.permute.xlu0 14
        %414 = vperm.xlu0 %413, %v312
        %v415 = vpop.permute.xlu0 %414
        %vm416 = vcmp.eq.s32.totalorder %v314, %v415
        %v417 = vsel %vm416, 1, 0
        %v418 = vcvt.s32.f32 %v417
        %v419 = vadd.f32 %v412, %v418
        %420 = vset.pattern.permute.xlu0 15
        %421 = vperm.xlu0 %420, %v312
        %v422 = vpop.permute.xlu0 %421
        %vm423 = vcmp.eq.s32.totalorder %v314, %v422
        %v424 = vsel %vm423, 1, 0
        %v425 = vcvt.s32.f32 %v424
        %v426 = vadd.f32 %v419, %v425
        %v427 = vpack.c.bf16 %v426, %v426
        %v428 = vld [vmem:[#allocation5] sm:$0xf]
        %v429 = vld [vmem:[#allocation5 + $0x4] sm:$0xf]
        %v430 = vld [vmem:[#allocation5 + $0x8] sm:$0xf]
        %v431 = vld [vmem:[#allocation5 + $0xc] sm:$0xf]
        %v432 = vld [vmem:[#allocation5 + $0x10] sm:$0xf]
        %v433 = vld [vmem:[#allocation5 + $0x14] sm:$0xf]
        %v434 = vld [vmem:[#allocation5 + $0x18] sm:$0xf]
        %v435 = vld [vmem:[#allocation5 + $0x1c] sm:$0xf]
        %v436 = vld [vmem:[#allocation5 + $0x20] sm:$0xf]
        %v437 = vld [vmem:[#allocation5 + $0x24] sm:$0xf]
        %v438 = vld [vmem:[#allocation5 + $0x28] sm:$0xf]
        %v439 = vld [vmem:[#allocation5 + $0x2c] sm:$0xf]
        %v440 = vld [vmem:[#allocation5 + $0x30] sm:$0xf]
        %v441 = vld [vmem:[#allocation5 + $0x34] sm:$0xf]
        %v442 = vld [vmem:[#allocation5 + $0x38] sm:$0xf]
        %v443 = vld [vmem:[#allocation5 + $0x3c] sm:$0xf]
        %v460 = vunpack.c.l.b16 %v428
        %v461 = vunpack.c.l.b16 %v429
        %v462 = vunpack.c.l.b16 %v430
        %v463 = vunpack.c.l.b16 %v431
        %v464 = vunpack.c.l.b16 %v432
        %v465 = vunpack.c.l.b16 %v433
        %v466 = vunpack.c.l.b16 %v434
        %v467 = vunpack.c.l.b16 %v435
        %v468 = vunpack.c.l.b16 %v436
        %v469 = vunpack.c.l.b16 %v437
        %v470 = vunpack.c.l.b16 %v438
        %v471 = vunpack.c.l.b16 %v439
        %v472 = vunpack.c.l.b16 %v440
        %v473 = vunpack.c.l.b16 %v441
        %v474 = vunpack.c.l.b16 %v442
        %v475 = vunpack.c.l.b16 %v443
        %v476 = vpack.c.b16 %v461, %v460
        %v477 = vpack.c.b16 %v463, %v462
        %v478 = vpack.c.b16 %v465, %v464
        %v479 = vpack.c.b16 %v467, %v466
        %v480 = vpack.c.b16 %v469, %v468
        %v481 = vpack.c.b16 %v471, %v470
        %v482 = vpack.c.b16 %v473, %v472
        %v483 = vpack.c.b16 %v475, %v474
        %492 = vmatprep.subr.bf16.mxu0 0
        %493 = vmatpush1.bf16.msra.mxu0 %v476
        %494 = vmatprep.subr.bf16.mxu0 0
        %495 = vmatpush1.bf16.msra.mxu0 %v477
        %496 = vmatprep.subr.bf16.mxu0 0
        %497 = vmatpush1.bf16.msra.mxu0 %v478
        %498 = vmatprep.subr.bf16.mxu0 0
        %499 = vmatpush1.bf16.msra.mxu0 %v479
        %500 = vmatprep.subr.bf16.mxu0 0
        %501 = vmatpush1.bf16.msra.mxu0 %v480
        %502 = vmatprep.subr.bf16.mxu0 0
        %503 = vmatpush1.bf16.msra.mxu0 %v481
        %504 = vmatprep.subr.bf16.mxu0 0
        %505 = vmatpush1.bf16.msra.mxu0 %v482
        %506 = vmatprep.subr.bf16.mxu0 0
        %507 = vmatpush1.bf16.msra.mxu0 %v483
        %508 = vmatprep.subr.bf16.mxu0 0
        %509 = vmatpush1.bf16.msra.mxu0 0
        %510 = vmatprep.subr.bf16.mxu0 0
        %511 = vmatpush1.bf16.msra.mxu0 0
        %512 = vmatprep.subr.bf16.mxu0 0
        %513 = vmatpush1.bf16.msra.mxu0 0
        %514 = vmatprep.subr.bf16.mxu0 0
        %515 = vmatpush1.bf16.msra.mxu0 0
        %516 = vmatprep.subr.bf16.mxu0 0
        %517 = vmatpush1.bf16.msra.mxu0 0
        %518 = vmatprep.subr.bf16.mxu0 0
        %519 = vmatpush1.bf16.msra.mxu0 0
        %520 = vmatprep.subr.bf16.mxu0 0
        %521 = vmatpush1.bf16.msra.mxu0 0
        %522 = vmatprep.subr.bf16.mxu0 0
        %523 = vmatpush1.bf16.msra.mxu0 0
        %524 = vmatprep.mubr.bf16.mxu0 0
        %525 = vmatmul.mubr.bf16.gmra.mrb[0].mxu0 %v427
        %v526 = vpop.f32.mrb[0].mxu0
        %v527 = vadd.f32 0.0, %v526
        %v528 = vpop.f32.mrb[0].mxu0
        %v529 = vpop.f32.mrb[0].mxu0
        %v530 = vpop.f32.mrb[0].mxu0
        %531 = vdwg.mxu0
        %v532 = vmul.f32 %v527, 0.0625
        %v533 = vpack.c.bf16 %v532, %v532
        %v534 = vld [vmem:[#allocation7] sm:$0xf]
        %v535 = vld [vmem:[#allocation7 + $0x4] sm:$0xf]
        %v536 = vld [vmem:[#allocation7 + $0x8] sm:$0xf]
        %v537 = vld [vmem:[#allocation7 + $0xc] sm:$0xf]
        %v538 = vld [vmem:[#allocation7 + $0x10] sm:$0xf]
        %v539 = vld [vmem:[#allocation7 + $0x14] sm:$0xf]
        %v540 = vld [vmem:[#allocation7 + $0x18] sm:$0xf]
        %v541 = vld [vmem:[#allocation7 + $0x1c] sm:$0xf]
        %v542 = vld [vmem:[#allocation7 + $0x20] sm:$0xf]
        %v543 = vld [vmem:[#allocation7 + $0x24] sm:$0xf]
        %v544 = vld [vmem:[#allocation7 + $0x28] sm:$0xf]
        %v545 = vld [vmem:[#allocation7 + $0x2c] sm:$0xf]
        %v546 = vld [vmem:[#allocation7 + $0x30] sm:$0xf]
        %v547 = vld [vmem:[#allocation7 + $0x34] sm:$0xf]
        %v548 = vld [vmem:[#allocation7 + $0x38] sm:$0xf]
        %v549 = vld [vmem:[#allocation7 + $0x3c] sm:$0xf]
        %v550 = vld [vmem:[%s3] sm:$0x1]
        %v552 = vlaneseq
        %v553 = vshrl.u32 %v552, 7
        %v554 = vsub.s32 0, %v553
        %v555 = vrot.slane %v550, %v554
        %v573 = vunpack.c.l.b16 %v534
        %v574 = vunpack.c.l.b16 %v535
        %v575 = vunpack.c.l.b16 %v536
        %v576 = vunpack.c.l.b16 %v537
        %v577 = vunpack.c.l.b16 %v538
        %v578 = vunpack.c.l.b16 %v539
        %v579 = vunpack.c.l.b16 %v540
        %v580 = vunpack.c.l.b16 %v541
        %v581 = vunpack.c.l.b16 %v542
        %v582 = vunpack.c.l.b16 %v543
        %v583 = vunpack.c.l.b16 %v544
        %v584 = vunpack.c.l.b16 %v545
        %v585 = vunpack.c.l.b16 %v546
        %v586 = vunpack.c.l.b16 %v547
        %v587 = vunpack.c.l.b16 %v548
        %v588 = vunpack.c.l.b16 %v549
        %v589 = vpack.c.b16 %v574, %v573
        %v590 = vpack.c.b16 %v576, %v575
        %v591 = vpack.c.b16 %v578, %v577
        %v592 = vpack.c.b16 %v580, %v579
        %v593 = vpack.c.b16 %v582, %v581
        %v594 = vpack.c.b16 %v584, %v583
        %v595 = vpack.c.b16 %v586, %v585
        %v596 = vpack.c.b16 %v588, %v587
        %605 = vmatprep.subr.bf16.mxu0 0
        %606 = vmatpush1.bf16.msra.mxu0 %v589
        %607 = vmatprep.subr.bf16.mxu0 0
        %608 = vmatpush1.bf16.msra.mxu0 %v590
        %609 = vmatprep.subr.bf16.mxu0 0
        %610 = vmatpush1.bf16.msra.mxu0 %v591
        %611 = vmatprep.subr.bf16.mxu0 0
        %612 = vmatpush1.bf16.msra.mxu0 %v592
        %613 = vmatprep.subr.bf16.mxu0 0
        %614 = vmatpush1.bf16.msra.mxu0 %v593
        %615 = vmatprep.subr.bf16.mxu0 0
        %616 = vmatpush1.bf16.msra.mxu0 %v594
        %617 = vmatprep.subr.bf16.mxu0 0
        %618 = vmatpush1.bf16.msra.mxu0 %v595
        %619 = vmatprep.subr.bf16.mxu0 0
        %620 = vmatpush1.bf16.msra.mxu0 %v596
        %621 = vmatprep.subr.bf16.mxu0 0
        %622 = vmatpush1.bf16.msra.mxu0 0
        %623 = vmatprep.subr.bf16.mxu0 0
        %624 = vmatpush1.bf16.msra.mxu0 0
        %625 = vmatprep.subr.bf16.mxu0 0
        %626 = vmatpush1.bf16.msra.mxu0 0
        %627 = vmatprep.subr.bf16.mxu0 0
        %628 = vmatpush1.bf16.msra.mxu0 0
        %629 = vmatprep.subr.bf16.mxu0 0
        %630 = vmatpush1.bf16.msra.mxu0 0
        %631 = vmatprep.subr.bf16.mxu0 0
        %632 = vmatpush1.bf16.msra.mxu0 0
        %633 = vmatprep.subr.bf16.mxu0 0
        %634 = vmatpush1.bf16.msra.mxu0 0
        %635 = vmatprep.subr.bf16.mxu0 0
        %636 = vmatpush1.bf16.msra.mxu0 0
        %637 = vmatprep.mubr.bf16.mxu0 0
        %638 = vmatmul.mubr.bf16.gmra.mrb[0].mxu0 %v533
        %v639 = vpop.f32.mrb[0].mxu0
        %v640 = vadd.f32 %v555, %v639
        %v641 = vpop.f32.mrb[0].mxu0
        %v642 = vpop.f32.mrb[0].mxu0
        %v643 = vpop.f32.mrb[0].mxu0
        %644 = vdwg.mxu0
        %v645 = vmax.f32 %v640, 0.0
        %v646 = vpack.c.bf16 %v645, %v645
        %v647 = vld [vmem:[#allocation8] sm:$0xf]
        %v648 = vld [vmem:[#allocation8 + $0x4] sm:$0xf]
        %v649 = vld [vmem:[#allocation8 + $0x8] sm:$0xf]
        %v650 = vld [vmem:[#allocation8 + $0xc] sm:$0xf]
        %v651 = vld [vmem:[#allocation8 + $0x10] sm:$0xf]
        %v652 = vld [vmem:[#allocation8 + $0x14] sm:$0xf]
        %v653 = vld [vmem:[#allocation8 + $0x18] sm:$0xf]
        %v654 = vld [vmem:[#allocation8 + $0x1c] sm:$0xf]
        %v655 = vld [vmem:[#allocation8 + $0x20] sm:$0xf]
        %v656 = vld [vmem:[#allocation8 + $0x24] sm:$0xf]
        %v657 = vld [vmem:[#allocation8 + $0x28] sm:$0xf]
        %v658 = vld [vmem:[#allocation8 + $0x2c] sm:$0xf]
        %v659 = vld [vmem:[#allocation8 + $0x30] sm:$0xf]
        %v660 = vld [vmem:[#allocation8 + $0x34] sm:$0xf]
        %v661 = vld [vmem:[#allocation8 + $0x38] sm:$0xf]
        %v662 = vld [vmem:[#allocation8 + $0x3c] sm:$0xf]
        %v663 = vld [vmem:[%s5] sm:$0x1]
        %v665 = vlaneseq
        %v666 = vshrl.u32 %v665, 7
        %v667 = vsub.s32 0, %v666
        %v668 = vrot.slane %v663, %v667
        %v686 = vunpack.c.l.b16 %v647
        %v687 = vunpack.c.l.b16 %v648
        %v688 = vunpack.c.l.b16 %v649
        %v689 = vunpack.c.l.b16 %v650
        %v690 = vunpack.c.l.b16 %v651
        %v691 = vunpack.c.l.b16 %v652
        %v692 = vunpack.c.l.b16 %v653
        %v693 = vunpack.c.l.b16 %v654
        %v694 = vunpack.c.l.b16 %v655
        %v695 = vunpack.c.l.b16 %v656
        %v696 = vunpack.c.l.b16 %v657
        %v697 = vunpack.c.l.b16 %v658
        %v698 = vunpack.c.l.b16 %v659
        %v699 = vunpack.c.l.b16 %v660
        %v700 = vunpack.c.l.b16 %v661
        %v701 = vunpack.c.l.b16 %v662
        %v702 = vpack.c.b16 %v687, %v686
        %v703 = vpack.c.b16 %v689, %v688
        %v704 = vpack.c.b16 %v691, %v690
        %v705 = vpack.c.b16 %v693, %v692
        %v706 = vpack.c.b16 %v695, %v694
        %v707 = vpack.c.b16 %v697, %v696
        %v708 = vpack.c.b16 %v699, %v698
        %v709 = vpack.c.b16 %v701, %v700
        %718 = vmatprep.subr.bf16.mxu0 0
        %719 = vmatpush1.bf16.msra.mxu0 %v702
        %720 = vmatprep.subr.bf16.mxu0 0
        %721 = vmatpush1.bf16.msra.mxu0 %v703
        %722 = vmatprep.subr.bf16.mxu0 0
        %723 = vmatpush1.bf16.msra.mxu0 %v704
        %724 = vmatprep.subr.bf16.mxu0 0
        %725 = vmatpush1.bf16.msra.mxu0 %v705
        %726 = vmatprep.subr.bf16.mxu0 0
        %727 = vmatpush1.bf16.msra.mxu0 %v706
        %728 = vmatprep.subr.bf16.mxu0 0
        %729 = vmatpush1.bf16.msra.mxu0 %v707
        %730 = vmatprep.subr.bf16.mxu0 0
        %731 = vmatpush1.bf16.msra.mxu0 %v708
        %732 = vmatprep.subr.bf16.mxu0 0
        %733 = vmatpush1.bf16.msra.mxu0 %v709
        %734 = vmatprep.subr.bf16.mxu0 0
        %735 = vmatpush1.bf16.msra.mxu0 0
        %736 = vmatprep.subr.bf16.mxu0 0
        %737 = vmatpush1.bf16.msra.mxu0 0
        %738 = vmatprep.subr.bf16.mxu0 0
        %739 = vmatpush1.bf16.msra.mxu0 0
        %740 = vmatprep.subr.bf16.mxu0 0
        %741 = vmatpush1.bf16.msra.mxu0 0
        %742 = vmatprep.subr.bf16.mxu0 0
        %743 = vmatpush1.bf16.msra.mxu0 0
        %744 = vmatprep.subr.bf16.mxu0 0
        %745 = vmatpush1.bf16.msra.mxu0 0
        %746 = vmatprep.subr.bf16.mxu0 0
        %747 = vmatpush1.bf16.msra.mxu0 0
        %748 = vmatprep.subr.bf16.mxu0 0
        %749 = vmatpush1.bf16.msra.mxu0 0
        %750 = vmatprep.mubr.bf16.mxu0 0
        %751 = vmatmul.mubr.bf16.gmra.mrb[0].mxu0 %v646
        %v752 = vpop.f32.mrb[0].mxu0
        %v753 = vadd.f32 %v668, %v752
        %v754 = vpop.f32.mrb[0].mxu0
        %v755 = vpop.f32.mrb[0].mxu0
        %v756 = vpop.f32.mrb[0].mxu0
        %757 = vdwg.mxu0
        %758 = vst [vmem:[%s310] sm:$0xff] %v753
        %s759 = sand.u32 %s164, 1
        %s760 = scalar_lea.sflag [#allocation4], %s759
        %s761 = sand.u32 %s164, 1
        %s762 = smul.addr %s761, 8
        %s763 = scalar_lea.vmem [#allocation10], %s762
        // Predicated region
        $region61: #{tpu_custom_call.1} parent=43 // pred_check
          %p764 = pneg %p174
        $region62: #{tpu_custom_call.1} parent=43 // pred_check_branch
          %766 = sbr.rel (%p764) target = $region64
        $region63: #{tpu_custom_call.1} parent=43 // pred_region
          %s768 = ssub.s32 128, 128
          %769 = vsyncadd %s760, %s768
          %s770 = smul.addr %s25, 128
          %s771 = scalar_lea.hbm %s6, %s770
          %s773 = sshll.u32 %s763, 4
          %s774 = int_to_ptr.vmem [resolvable:$true] %s773
          %776 = dma.vmem_to_hbm [thread:$0]  %s774, 128, %s771, %s760
        $region64: #{tpu_custom_call.1} parent=43 // pred_fallthru
          _
      $region44: #{tpu_custom_call.1} parent=5 // pred_fallthru
        _
      %p777 = scmp.le.s32.totalorder 2, %s20
      // Predicated region
      $region65: #{tpu_custom_call.1} parent=5 // pred_check
        %p778 = pneg %p777
      $region66: #{tpu_custom_call.1} parent=5 // pred_check_branch
        %780 = sbr.rel (%p778) target = $region68
      $region67: #{tpu_custom_call.1} parent=5 // pred_region
        %s781 = ssub.s32 %s20, 2
        // Predicated region
        $region69: #{tpu_custom_call.1} parent=67 // pred_check
          %p782 = pneg %p180
        $region70: #{tpu_custom_call.1} parent=67 // pred_check_branch
          %784 = sbr.rel (%p782) target = $region72
        $region71: #{tpu_custom_call.1} parent=67 // pred_region
          %s785 = sand.u32 %s165, 1
          %s786 = scalar_lea.sflag [#allocation4], %s785
          %s787 = sand.u32 %s165, 1
          %s788 = smul.addr %s787, 8
          %s789 = scalar_lea.vmem [#allocation10], %s788
          %790 = dma.done %s786, 128
        $region72: #{tpu_custom_call.1} parent=67 // pred_fallthru
          _
      $region68: #{tpu_custom_call.1} parent=5 // pred_fallthru
        _
    $region6: #{tpu_custom_call.1} parent=1 // loop_footer
      %s24 = sadd.s32 1, %s20
    $region7: #{tpu_custom_call.1} parent=1 // loop_footer_branch
      %19 = sbr.rel target = $region3
    $region8: #{tpu_custom_call.1} parent=1 // loop_exit
      _
    %791 = vsyncpa [#allocation3], 1
    %s792 = scalar_lea.sflag [#allocation3], 1
    %793 = vsyncpa %s792, 1
    %794 = vsyncpa [#allocation6], 1
    %795 = vsyncpa [#allocation9], 1
    %796 = vsyncpa [#allocation4], 1
    %s797 = scalar_lea.sflag [#allocation4], 1
    %798 = vsyncpa %s797, 1

</llo_original>
